<compile_context>
chip_gen: v5e
topology: v5e:2x2
jax: 0.10.0
libtpu: 0.0.40
codegen_flags: <defaults>
</compile_context>

<pallas_src>
import functools

import jax
import jax.numpy as jnp
import numpy as np
from jax.experimental import pallas as pl
from jax.experimental.pallas import tpu as pltpu

_LANE = 128  # TPU lane width


def _seghead_kernel(p_ref, w1_ref, w2_ref, b2_ref, out_ref):
    """Fused relu -> conv1 (im2col matmul) -> relu -> conv2 (1x1 matmul) + bias.

    p_ref:   (TM, K1)   folded im2col patch rows (K1 = G * 9*Cin)
    w1_ref:  (K1, N1)   block-diag conv1 weights (N1 = G * Cmid)
    w2_ref:  (N1, N2)   block-diag conv2 weights (N2 = G * Cout, lane-dense)
    b2_ref:  (1, N2)    conv2 bias, tiled G times (kept in f32)
    out_ref: (TM, N2)   lane-dense, unpadded output rows (f32)
    """
    # relu in f32 (exact; avoids bf16 VPU ops on v5e), then cast for the MXU.
    p = jnp.maximum(p_ref[...].astype(jnp.float32), 0.0).astype(w1_ref.dtype)
    h = jnp.dot(p, w1_ref[...], preferred_element_type=jnp.float32)
    h = jnp.maximum(h, 0.0).astype(w2_ref.dtype)
    out = jnp.dot(h, w2_ref[...], preferred_element_type=jnp.float32)
    out = out + b2_ref[...].astype(jnp.float32)
    out_ref[...] = out.astype(out_ref.dtype)


def _im2col_3x3(x_nhwc):
    """(N, H, W, C) -> (N*H*W, 9*C) patch matrix for a 3x3 / pad=1 conv."""
    N, H, W, C = x_nhwc.shape
    xp = jnp.pad(x_nhwc, ((0, 0), (1, 1), (1, 1), (0, 0)))
    cols = [xp[:, dy:dy + H, dx:dx + W, :] for dy in range(3) for dx in range(3)]
    return jnp.concatenate(cols, axis=-1).reshape(N * H * W, 9 * C)


def _round_up(x, m):
    return ((x + m - 1) // m) * m


def _num_tensorcores():
    """2 TensorCores on v7x, 1 on v5e/v6e. Static tiling hint only."""
    try:
        kind = jax.devices()[0].device_kind.lower()
    except Exception:  # pragma: no cover - e.g. no devices visible at trace time
        return 1
    return 2 if "v7" in kind else 1


@functools.partial(jax.jit,
                   static_argnames=("scale_factor", "row_block", "compute_dtype"))
def segmenthead_forward(x_nchw, w1, w2, b2, *, scale_factor=None,
                        row_block=1024, compute_dtype=jnp.bfloat16):
    """x: (N, Cin, H, W); w1: (Cmid, Cin, 3, 3); w2: (Cout, Cmid, 1, 1); b2: (Cout,)."""
    N, Cin, H, W = x_nchw.shape
    Cmid = w1.shape[0]
    Cout = w2.shape[0]
    K9 = 9 * Cin
    row_block = max(8, _round_up(row_block, 8))

    # ---- lane-dense output packing ---------------------------------------
    # Fold G consecutive spatial positions (x Cout channels each) into one
    # 128-lane output row using block-diagonal weights -> unmasked, unpadded
    # stores and no post-kernel slice pass.  Falls back to column padding only
    # when Cout does not divide 128.
    if Cout < _LANE and _LANE % Cout == 0:
        G = _LANE // Cout
    else:
        G = 1
    K1 = G * K9                      # folded patch width (never padded - review)
    N1 = G * Cmid                    # folded conv1 output channels
    N2r = G * Cout                   # real folded output width
    N2 = _round_up(N2r, _LANE)       # == N2r when folded

    # ---- wrapper glue (all fused under jit) -------------------------------
    x_nhwc = jnp.transpose(x_nchw, (0, 2, 3, 1)).astype(jnp.float32)
    patches = _im2col_3x3(x_nhwc)                               # (R, 9*Cin)
    R = N * H * W
    Rf = pl.cdiv(R, G)                                          # folded rows

    # generation-aware row tiling: 1 grid step on single-TC v5e/v6e when the
    # rows fit one block; an even >=2-block grid on 2-TC v7x.
    ntc = _num_tensorcores()
    if ntc == 1:
        tm = min(row_block, _round_up(Rf, 8))
        nblk = pl.cdiv(Rf, tm)
    else:
        tm = min(row_block, _round_up(pl.cdiv(Rf, ntc), 8))
        nblk = pl.cdiv(Rf, tm)
        if nblk % ntc:
            nblk += ntc - nblk % ntc
    rf_pad = nblk * tm

    patches = jnp.pad(patches, ((0, rf_pad * G - R), (0, 0)))
    patches = patches.reshape(rf_pad, K1).astype(compute_dtype)

    # conv1 weights: OIHW -> (9*Cin, Cmid); conv2: (Cout, Cmid, 1, 1) -> (Cmid, Cout).
    w1_mat = jnp.transpose(w1, (2, 3, 1, 0)).reshape(K9, Cmid).astype(jnp.float32)
    w2_mat = jnp.transpose(w2[:, :, 0, 0], (1, 0)).astype(jnp.float32)
    eye = jnp.eye(G, dtype=jnp.float32)
    w1_f = jnp.kron(eye, w1_mat)                                # (K1, N1) block-diag
    w2_f = jnp.kron(eye, w2_mat)                                # (N1, N2r) block-diag
    b2_f = jnp.tile(b2.astype(jnp.float32), G)                  # (N2r,)
    if N2 != N2r:                                               # fallback path only
        w2_f = jnp.pad(w2_f, ((0, 0), (0, N2 - N2r)))
        b2_f = jnp.pad(b2_f, (0, N2 - N2r))
    w1_f = w1_f.astype(compute_dtype)
    w2_f = w2_f.astype(compute_dtype)
    b2_row = b2_f.reshape(1, N2)                                # bias stays f32

    out_fold = pl.pallas_call(
        _seghead_kernel,
        out_shape=jax.ShapeDtypeStruct((rf_pad, N2), jnp.float32),
        grid=(nblk,),
        in_specs=[
            pl.BlockSpec((tm, K1), lambda i: (i, 0)),
            pl.BlockSpec((K1, N1), lambda i: (0, 0)),
            pl.BlockSpec((N1, N2), lambda i: (0, 0)),
            pl.BlockSpec((1, N2), lambda i: (0, 0)),
        ],
        out_specs=pl.BlockSpec((tm, N2), lambda i: (i, 0)),
        compiler_params=pltpu.CompilerParams(dimension_semantics=("parallel",)),
    )(patches, w1_f, w2_f, b2_row)

    # unpack: (rf_pad, G*Cout) -> (R, Cout) -> (N, H, W, Cout)   (no copy pass when folded)
    out_flat = out_fold[:, :N2r].reshape(rf_pad * G, Cout)[:R]
    out_nhwc = out_flat.reshape(N, H, W, Cout)

    if scale_factor is not None:
        # F.interpolate(mode='bilinear', align_corners=False) == half-pixel resize.
        out_nhwc = jax.image.resize(
            out_nhwc, (N, H * scale_factor, W * scale_factor, Cout), method="bilinear")

    return jnp.transpose(out_nhwc, (0, 3, 1, 2))                # back to NCHW


def _reference_forward(x_nchw, w1, w2, b2):
    """Pure-JAX reference (lax conv, f32) for the correctness check."""
    xr = jnp.maximum(x_nchw, 0.0)
    y = jax.lax.conv_general_dilated(
        xr, w1, window_strides=(1, 1), padding=((1, 1), (1, 1)),
        dimension_numbers=("NCHW", "OIHW", "NCHW"))
    yr = jnp.maximum(y, 0.0)
    out = jax.lax.conv_general_dilated(
        yr, w2, window_strides=(1, 1), padding=((0, 0), (0, 0)),
        dimension_numbers=("NCHW", "OIHW", "NCHW"))
    return out + b2.reshape(1, -1, 1, 1)


if __name__ == "__main__":
    # Small shapes consistent with the module: inplanes=8, interplanes=16, outplanes=8.
    N, Cin, H, W = 2, 8, 16, 16
    Cmid, Cout = 16, 8

    key = jax.random.PRNGKey(0)
    kx, k1, k2, kb = jax.random.split(key, 4)

    x = jax.random.normal(kx, (N, Cin, H, W), dtype=jnp.float32)
    # Deterministic kaiming-ish init; PyTorch OIHW conv layout.
    w1 = jax.random.normal(k1, (Cmid, Cin, 3, 3), dtype=jnp.float32) * (1.0 / np.sqrt(Cin * 9))
    w2 = jax.random.normal(k2, (Cout, Cmid, 1, 1), dtype=jnp.float32) * (1.0 / np.sqrt(Cmid))
    b2 = jax.random.normal(kb, (Cout,), dtype=jnp.float32) * 0.01

    ref = jax.block_until_ready(_reference_forward(x, w1, w2, b2))

    # exact-precision check: f32 operands end-to-end.
    out_f32 = jax.block_until_ready(
        segmenthead_forward(x, w1, w2, b2, compute_dtype=jnp.float32))
    np.testing.assert_allclose(np.asarray(out_f32), np.asarray(ref), rtol=1e-4, atol=1e-4)

    # production path: bf16 matmul operands with f32 accumulation (looser tolerance).
    out_bf16 = jax.block_until_ready(segmenthead_forward(x, w1, w2, b2))
    np.testing.assert_allclose(np.asarray(out_bf16), np.asarray(ref), rtol=5e-2, atol=5e-2)

    print("KERNEL_OK")
</pallas_src>

<mosaic_0001>
module attributes {stable_mosaic.version = 11 : i64} {
  func.func @_seghead_kernel(%arg0: i32, %arg1: memref<32x1152xf32, #tpu.memory_space<vmem>>, %arg2: memref<1152x256xf32, #tpu.memory_space<vmem>>, %arg3: memref<256x128xf32, #tpu.memory_space<vmem>>, %arg4: memref<1x128xf32, #tpu.memory_space<vmem>>, %arg5: memref<32x128xf32, #tpu.memory_space<vmem>>) attributes {dimension_semantics = [#tpu.dimension_semantics<parallel>], iteration_bounds = array<i64: 1>, scalar_prefetch = 0 : i64, scratch_operands = 0 : i64, tpu.core_type = #tpu.core_type<tc>, window_params = [{transform_indices = @transform_0, window_bounds = array<i64: 32, 1152>}, {pipeline_mode = #tpu.pipeline_mode<synchronous>, transform_indices = @transform_1, window_bounds = array<i64: 1152, 256>}, {pipeline_mode = #tpu.pipeline_mode<synchronous>, transform_indices = @transform_2, window_bounds = array<i64: 256, 128>}, {pipeline_mode = #tpu.pipeline_mode<synchronous>, transform_indices = @transform_3, window_bounds = array<i64: 1, 128>}, {transform_indices = @transform_4, window_bounds = array<i64: 32, 128>}]} {
    %c0 = arith.constant 0 : index
    %c0_0 = arith.constant 0 : index
    %0 = vector.load %arg1[%c0, %c0_0] : memref<32x1152xf32, #tpu.memory_space<vmem>>, vector<32x1152xf32>
    %cst = arith.constant 0.000000e+00 : f32
    %1 = vector.broadcast %cst : f32 to vector<32x1152xf32>
    %2 = arith.maximumf %0, %1 : vector<32x1152xf32>
    %c0_1 = arith.constant 0 : index
    %c0_2 = arith.constant 0 : index
    %3 = vector.load %arg2[%c0_1, %c0_2] : memref<1152x256xf32, #tpu.memory_space<vmem>>, vector<1152x256xf32>
    %cst_3 = arith.constant dense<0.000000e+00> : vector<32x256xf32>
    %4 = tpu.matmul %2, %3, %cst_3 {dimension_numbers = #tpu.dot_dimension_numbers<[1], [0], [0], [1], [0, 0, 1, 1], [], []>} : vector<32x1152xf32>, vector<1152x256xf32>, vector<32x256xf32> -> vector<32x256xf32>
    %cst_4 = arith.constant 0.000000e+00 : f32
    %5 = vector.broadcast %cst_4 : f32 to vector<32x256xf32>
    %6 = arith.maximumf %4, %5 : vector<32x256xf32>
    %c0_5 = arith.constant 0 : index
    %c0_6 = arith.constant 0 : index
    %7 = vector.load %arg3[%c0_5, %c0_6] : memref<256x128xf32, #tpu.memory_space<vmem>>, vector<256x128xf32>
    %cst_7 = arith.constant dense<0.000000e+00> : vector<32x128xf32>
    %8 = tpu.matmul %6, %7, %cst_7 {dimension_numbers = #tpu.dot_dimension_numbers<[1], [0], [0], [1], [0, 0, 1, 1], [], []>} : vector<32x256xf32>, vector<256x128xf32>, vector<32x128xf32> -> vector<32x128xf32>
    %c0_8 = arith.constant 0 : index
    %c0_9 = arith.constant 0 : index
    %9 = vector.load %arg4[%c0_8, %c0_9] : memref<1x128xf32, #tpu.memory_space<vmem>>, vector<1x128xf32>
    %10 = vector.broadcast %9 : vector<1x128xf32> to vector<32x128xf32>
    %11 = arith.addf %8, %10 : vector<32x128xf32>
    %c0_10 = arith.constant 0 : index
    %c0_11 = arith.constant 0 : index
    %12 = vector.load %arg5[%c0_10, %c0_11] : memref<32x128xf32, #tpu.memory_space<vmem>>, vector<32x128xf32>
    tpu.vector_store %arg5[%c0_10, %c0_11], %11 {strides = array<i32>} : memref<32x128xf32, #tpu.memory_space<vmem>>, vector<32x128xf32>,
    return
  }
  func.func @transform_0(%arg0: i32) -> (i32, i32) {
    %c0_i32 = arith.constant 0 : i32
    %c0_i32_0 = arith.constant 0 : i32
    return %arg0, %c0_i32 : i32, i32
  }
  func.func @transform_1(%arg0: i32) -> (i32, i32) {
    %c0_i32 = arith.constant 0 : i32
    %c0_i32_0 = arith.constant 0 : i32
    %c0_i32_1 = arith.constant 0 : i32
    return %c0_i32, %c0_i32_0 : i32, i32
  }
  func.func @transform_2(%arg0: i32) -> (i32, i32) {
    %c0_i32 = arith.constant 0 : i32
    %c0_i32_0 = arith.constant 0 : i32
    %c0_i32_1 = arith.constant 0 : i32
    return %c0_i32, %c0_i32_0 : i32, i32
  }
  func.func @transform_3(%arg0: i32) -> (i32, i32) {
    %c0_i32 = arith.constant 0 : i32
    %c0_i32_0 = arith.constant 0 : i32
    %c0_i32_1 = arith.constant 0 : i32
    return %c0_i32, %c0_i32_0 : i32, i32
  }
  func.func @transform_4(%arg0: i32) -> (i32, i32) {
    %c0_i32 = arith.constant 0 : i32
    %c0_i32_0 = arith.constant 0 : i32
    return %arg0, %c0_i32 : i32, i32
  }
}

</mosaic_0001>

<llo_original>
// kernel: tile.8
$region0: #{tile.8}
  #allocation0 [shape = 's32[1]{0}', space=sflag, size = 0x4, scoped, tag = 'scoped memory for tile.8']
  %s0 = inlined_call_operand.vmem [shape: f32[8], index: 0, kind: input, shape index: {}]
  %s1 = inlined_call_operand.vmem [shape: f32[16,8], index: 1, kind: output, shape index: {}]
  // Predicated region
  $region2: #{tile.8} parent=0 // pred_check
    _
  $region3: #{tile.8} parent=0 // pred_check_branch
    %3 = sbr.rel (0) target = $region5
  $region4: #{tile.8} parent=0 // pred_region
    _
  $region5: #{tile.8} parent=0 // pred_fallthru
    _
  %v4 = vld [vmem:[%s0] ss:$0 sm:$0xff]
  %5 = vst [vmem:[%s1] sm:$0xff] %v4
  %s6 = scalar_lea.vmem %s1, 8
  %7 = vst [vmem:[%s6] sm:$0xff] %v4

// kernel: tile.9
$region0: #{tile.9}
  %s0 = inlined_call_operand.vmem [shape: f32[16,8], index: 0, kind: input, shape index: {}]
  %s1 = inlined_call_operand.vmem [shape: f32[1,128], index: 1, kind: output, shape index: {}]
  $region1: #{tile.9} parent=0
    #allocation0 [shape = 'u8[4096]{0}', space=vmem, size = 0x1000, scoped, tag = 'scoped mem for output reshape']
    %v2 = vld [vmem:[%s0] sm:$0x1]
    %vm3 = vcmask 64512
    %4 = vst.msk [vmem:[#allocation0] sm:$0x1] %vm3, %v2
    %s5 = scalar_lea.vmem %s0, 15
    %v6 = vld [vmem:[%s5] sm:$0x1]
    %7 = vrot.lane.b32.xlu0 %v6, 120
    %v8 = vpop.permute.xlu0 %7
    %vm9 = vcmask 1048512
    %10 = vst.msk [vmem:[#allocation0] sm:$0x1] %vm9, %v8
    %s11 = scalar_lea.vmem %s0, 14
    %v12 = vld [vmem:[%s11] sm:$0x1]
    %13 = vrot.lane.b32.xlu0 %v12, 112
    %v14 = vpop.permute.xlu0 %13
    %vm15 = vcmask 982912
    %16 = vst.msk [vmem:[#allocation0] sm:$0x1] %vm15, %v14
    %s17 = scalar_lea.vmem %s0, 13
    %v18 = vld [vmem:[%s17] sm:$0x1]
    %19 = vrot.lane.b32.xlu0 %v18, 104
    %v20 = vpop.permute.xlu0 %19
    %vm21 = vcmask 917312
    %22 = vst.msk [vmem:[#allocation0] sm:$0x1] %vm21, %v20
    %s23 = scalar_lea.vmem %s0, 12
    %v24 = vld [vmem:[%s23] sm:$0x1]
    %25 = vrot.lane.b32.xlu0 %v24, 96
    %v26 = vpop.permute.xlu0 %25
    %vm27 = vcmask 851712
    %28 = vst.msk [vmem:[#allocation0] sm:$0x1] %vm27, %v26
    %s29 = scalar_lea.vmem %s0, 11
    %v30 = vld [vmem:[%s29] sm:$0x1]
    %31 = vrot.lane.b32.xlu0 %v30, 88
    %v32 = vpop.permute.xlu0 %31
    %vm33 = vcmask 786112
    %34 = vst.msk [vmem:[#allocation0] sm:$0x1] %vm33, %v32
    %s35 = scalar_lea.vmem %s0, 10
    %v36 = vld [vmem:[%s35] sm:$0x1]
    %37 = vrot.lane.b32.xlu0 %v36, 80
    %v38 = vpop.permute.xlu0 %37
    %vm39 = vcmask 720512
    %40 = vst.msk [vmem:[#allocation0] sm:$0x1] %vm39, %v38
    %s41 = scalar_lea.vmem %s0, 9
    %v42 = vld [vmem:[%s41] sm:$0x1]
    %43 = vrot.lane.b32.xlu0 %v42, 72
    %v44 = vpop.permute.xlu0 %43
    %vm45 = vcmask 654912
    %46 = vst.msk [vmem:[#allocation0] sm:$0x1] %vm45, %v44
    %s47 = scalar_lea.vmem %s0, 8
    %v48 = vld [vmem:[%s47] sm:$0x1]
    %49 = vrot.lane.b32.xlu0 %v48, 64
    %v50 = vpop.permute.xlu0 %49
    %vm51 = vcmask 589312
    %52 = vst.msk [vmem:[#allocation0] sm:$0x1] %vm51, %v50
    %s53 = scalar_lea.vmem %s0, 7
    %v54 = vld [vmem:[%s53] sm:$0x1]
    %55 = vrot.lane.b32.xlu0 %v54, 56
    %v56 = vpop.permute.xlu0 %55
    %vm57 = vcmask 523712
    %58 = vst.msk [vmem:[#allocation0] sm:$0x1] %vm57, %v56
    %s59 = scalar_lea.vmem %s0, 6
    %v60 = vld [vmem:[%s59] sm:$0x1]
    %61 = vrot.lane.b32.xlu0 %v60, 48
    %v62 = vpop.permute.xlu0 %61
    %vm63 = vcmask 458112
    %64 = vst.msk [vmem:[#allocation0] sm:$0x1] %vm63, %v62
    %s65 = scalar_lea.vmem %s0, 5
    %v66 = vld [vmem:[%s65] sm:$0x1]
    %67 = vrot.lane.b32.xlu0 %v66, 40
    %v68 = vpop.permute.xlu0 %67
    %vm69 = vcmask 392512
    %70 = vst.msk [vmem:[#allocation0] sm:$0x1] %vm69, %v68
    %s71 = scalar_lea.vmem %s0, 4
    %v72 = vld [vmem:[%s71] sm:$0x1]
    %73 = vrot.lane.b32.xlu0 %v72, 32
    %v74 = vpop.permute.xlu0 %73
    %vm75 = vcmask 326912
    %76 = vst.msk [vmem:[#allocation0] sm:$0x1] %vm75, %v74
    %s77 = scalar_lea.vmem %s0, 3
    %v78 = vld [vmem:[%s77] sm:$0x1]
    %79 = vrot.lane.b32.xlu0 %v78, 24
    %v80 = vpop.permute.xlu0 %79
    %vm81 = vcmask 261312
    %82 = vst.msk [vmem:[#allocation0] sm:$0x1] %vm81, %v80
    %s83 = scalar_lea.vmem %s0, 2
    %v84 = vld [vmem:[%s83] sm:$0x1]
    %85 = vrot.lane.b32.xlu0 %v84, 16
    %v86 = vpop.permute.xlu0 %85
    %vm87 = vcmask 195712
    %88 = vst.msk [vmem:[#allocation0] sm:$0x1] %vm87, %v86
    %s89 = scalar_lea.vmem %s0, 1
    %v90 = vld [vmem:[%s89] sm:$0x1]
    %91 = vrot.lane.b32.xlu0 %v90, 8
    %v92 = vpop.permute.xlu0 %91
    %vm93 = vcmask 130112
    %94 = vst.msk [vmem:[#allocation0] sm:$0x1] %vm93, %v92
    %s96 = ssub.s32 2, 1
    %v97 = vld [vmem:[#allocation0] sm:%s96]
    %s99 = ssub.s32 2, 1
    %100 = vst [vmem:[%s1] sm:%s99] %v97

// kernel: segmenthead_forward.1
$region0: #{segmenthead_forward.1}
  #allocation0 [shape = 'u32[]', space=smem, size = 0x4, offset = 0x4, fixed_abs, tag = 'smem constant byte address 0x4 - core index']
  #allocation1 [shape = 'u32[72,128]{1,0:T(1,128)}', space=vmem, size = 0x9000, scoped, tag = 'internal scratch']
  %s0 = inlined_call_operand.vmem [shape: f32[32,1152], index: 0, kind: input, shape index: {}]
  %s1 = inlined_call_operand.vmem [shape: f32[1152,256], index: 1, kind: input, shape index: {}]
  %s2 = inlined_call_operand.vmem [shape: f32[256,128], index: 2, kind: input, shape index: {}]
  %s3 = inlined_call_operand.vmem [shape: f32[1,128], index: 3, kind: input, shape index: {}]
  %s4 = inlined_call_operand.vmem [shape: f32[32,128], index: 4, kind: output, shape index: {}]
  %s5 = sld [smem:[#allocation0]]
  $region26: #{segmenthead_forward.1} parent=0
    _
  %s7 = ssub.s32 1, %s5
  %s8 = scalar_select 0, %s7, %s5
  // Predicated region
  $region2: #{segmenthead_forward.1} parent=0 // pred_check
    _
  $region3: #{segmenthead_forward.1} parent=0 // pred_check_branch
    %10 = sbr.rel (0) target = $region5
  $region4: #{segmenthead_forward.1} parent=0 // pred_region
    _
  $region5: #{segmenthead_forward.1} parent=0 // pred_fallthru
    _
  // Predicated region
  $region6: #{segmenthead_forward.1} parent=0 // pred_check
    _
  $region7: #{segmenthead_forward.1} parent=0 // pred_check_branch
    %12 = sbr.rel (0) target = $region9
  $region8: #{segmenthead_forward.1} parent=0 // pred_region
    _
  $region9: #{segmenthead_forward.1} parent=0 // pred_fallthru
    _
  // Predicated region
  $region10: #{segmenthead_forward.1} parent=0 // pred_check
    _
  $region11: #{segmenthead_forward.1} parent=0 // pred_check_branch
    %14 = sbr.rel (0) target = $region13
  $region12: #{segmenthead_forward.1} parent=0 // pred_region
    _
  $region13: #{segmenthead_forward.1} parent=0 // pred_fallthru
    _
  // Predicated region
  $region14: #{segmenthead_forward.1} parent=0 // pred_check
    _
  $region15: #{segmenthead_forward.1} parent=0 // pred_check_branch
    %16 = sbr.rel (0) target = $region17
  $region16: #{segmenthead_forward.1} parent=0 // pred_region
    _
  $region17: #{segmenthead_forward.1} parent=0 // pred_fallthru
    _
  %v17 = vld [vmem:[%s0] sm:$0xff]
  %v18 = vld [vmem:[%s0 + $0x8] sm:$0xff]
  %v19 = vld [vmem:[%s0 + $0x10] sm:$0xff]
  %v20 = vld [vmem:[%s0 + $0x18] sm:$0xff]
  %v21 = vld [vmem:[%s0 + $0x20] sm:$0xff]
  %v22 = vld [vmem:[%s0 + $0x28] sm:$0xff]
  %v23 = vld [vmem:[%s0 + $0x30] sm:$0xff]
  %v24 = vld [vmem:[%s0 + $0x38] sm:$0xff]
  %v25 = vld [vmem:[%s0 + $0x40] sm:$0xff]
  %v26 = vld [vmem:[%s0 + $0x48] sm:$0xff]
  %v27 = vld [vmem:[%s0 + $0x50] sm:$0xff]
  %v28 = vld [vmem:[%s0 + $0x58] sm:$0xff]
  %v29 = vld [vmem:[%s0 + $0x60] sm:$0xff]
  %v30 = vld [vmem:[%s0 + $0x68] sm:$0xff]
  %v31 = vld [vmem:[%s0 + $0x70] sm:$0xff]
  %v32 = vld [vmem:[%s0 + $0x78] sm:$0xff]
  %v33 = vld [vmem:[%s0 + $0x80] sm:$0xff]
  %v34 = vld [vmem:[%s0 + $0x88] sm:$0xff]
  %v35 = vld [vmem:[%s0 + $0x90] sm:$0xff]
  %v36 = vld [vmem:[%s0 + $0x98] sm:$0xff]
  %v37 = vld [vmem:[%s0 + $0xa0] sm:$0xff]
  %v38 = vld [vmem:[%s0 + $0xa8] sm:$0xff]
  %v39 = vld [vmem:[%s0 + $0xb0] sm:$0xff]
  %v40 = vld [vmem:[%s0 + $0xb8] sm:$0xff]
  %v41 = vld [vmem:[%s0 + $0xc0] sm:$0xff]
  %v42 = vld [vmem:[%s0 + $0xc8] sm:$0xff]
  %v43 = vld [vmem:[%s0 + $0xd0] sm:$0xff]
  %v44 = vld [vmem:[%s0 + $0xd8] sm:$0xff]
  %v45 = vld [vmem:[%s0 + $0xe0] sm:$0xff]
  %v46 = vld [vmem:[%s0 + $0xe8] sm:$0xff]
  %v47 = vld [vmem:[%s0 + $0xf0] sm:$0xff]
  %v48 = vld [vmem:[%s0 + $0xf8] sm:$0xff]
  %v49 = vld [vmem:[%s0 + $0x100] sm:$0xff]
  %v50 = vld [vmem:[%s0 + $0x108] sm:$0xff]
  %v51 = vld [vmem:[%s0 + $0x110] sm:$0xff]
  %v52 = vld [vmem:[%s0 + $0x118] sm:$0xff]
  %v53 = vmax.f32 %v17, 0.0
  %v54 = vmax.f32 %v18, 0.0
  %v55 = vmax.f32 %v19, 0.0
  %v56 = vmax.f32 %v20, 0.0
  %v57 = vmax.f32 %v21, 0.0
  %v58 = vmax.f32 %v22, 0.0
  %v59 = vmax.f32 %v23, 0.0
  %v60 = vmax.f32 %v24, 0.0
  %v61 = vmax.f32 %v25, 0.0
  %v62 = vmax.f32 %v26, 0.0
  %v63 = vmax.f32 %v27, 0.0
  %v64 = vmax.f32 %v28, 0.0
  %v65 = vmax.f32 %v29, 0.0
  %v66 = vmax.f32 %v30, 0.0
  %v67 = vmax.f32 %v31, 0.0
  %v68 = vmax.f32 %v32, 0.0
  %v69 = vmax.f32 %v33, 0.0
  %v70 = vmax.f32 %v34, 0.0
  %v71 = vmax.f32 %v35, 0.0
  %v72 = vmax.f32 %v36, 0.0
  %v73 = vmax.f32 %v37, 0.0
  %v74 = vmax.f32 %v38, 0.0
  %v75 = vmax.f32 %v39, 0.0
  %v76 = vmax.f32 %v40, 0.0
  %v77 = vmax.f32 %v41, 0.0
  %v78 = vmax.f32 %v42, 0.0
  %v79 = vmax.f32 %v43, 0.0
  %v80 = vmax.f32 %v44, 0.0
  %v81 = vmax.f32 %v45, 0.0
  %v82 = vmax.f32 %v46, 0.0
  %v83 = vmax.f32 %v47, 0.0
  %v84 = vmax.f32 %v48, 0.0
  %v85 = vmax.f32 %v49, 0.0
  %v86 = vmax.f32 %v50, 0.0
  %v87 = vmax.f32 %v51, 0.0
  %v88 = vmax.f32 %v52, 0.0
  %v89 = vld [vmem:[%s1] sm:$0xff]
  %v90 = vld [vmem:[%s1 + $0x8] sm:$0xff]
  %v91 = vld [vmem:[%s1 + $0x10] sm:$0xff]
  %v92 = vld [vmem:[%s1 + $0x18] sm:$0xff]
  %v93 = vld [vmem:[%s1 + $0x20] sm:$0xff]
  %v94 = vld [vmem:[%s1 + $0x28] sm:$0xff]
  %v95 = vld [vmem:[%s1 + $0x30] sm:$0xff]
  %v96 = vld [vmem:[%s1 + $0x38] sm:$0xff]
  %v97 = vld [vmem:[%s1 + $0x40] sm:$0xff]
  %v98 = vld [vmem:[%s1 + $0x48] sm:$0xff]
  %v99 = vld [vmem:[%s1 + $0x50] sm:$0xff]
  %v100 = vld [vmem:[%s1 + $0x58] sm:$0xff]
  %v101 = vld [vmem:[%s1 + $0x60] sm:$0xff]
  %v102 = vld [vmem:[%s1 + $0x68] sm:$0xff]
  %v103 = vld [vmem:[%s1 + $0x70] sm:$0xff]
  %v104 = vld [vmem:[%s1 + $0x78] sm:$0xff]
  %v105 = vld [vmem:[%s1 + $0x80] sm:$0xff]
  %v106 = vld [vmem:[%s1 + $0x88] sm:$0xff]
  %v107 = vld [vmem:[%s1 + $0x90] sm:$0xff]
  %v108 = vld [vmem:[%s1 + $0x98] sm:$0xff]
  %v109 = vld [vmem:[%s1 + $0xa0] sm:$0xff]
  %v110 = vld [vmem:[%s1 + $0xa8] sm:$0xff]
  %v111 = vld [vmem:[%s1 + $0xb0] sm:$0xff]
  %v112 = vld [vmem:[%s1 + $0xb8] sm:$0xff]
  %v113 = vld [vmem:[%s1 + $0xc0] sm:$0xff]
  %v114 = vld [vmem:[%s1 + $0xc8] sm:$0xff]
  %v115 = vld [vmem:[%s1 + $0xd0] sm:$0xff]
  %v116 = vld [vmem:[%s1 + $0xd8] sm:$0xff]
  %v117 = vld [vmem:[%s1 + $0xe0] sm:$0xff]
  %v118 = vld [vmem:[%s1 + $0xe8] sm:$0xff]
  %v119 = vld [vmem:[%s1 + $0xf0] sm:$0xff]
  %v120 = vld [vmem:[%s1 + $0xf8] sm:$0xff]
  %v121 = vld [vmem:[%s1 + $0x100] sm:$0xff]
  %v122 = vld [vmem:[%s1 + $0x108] sm:$0xff]
  %v123 = vld [vmem:[%s1 + $0x110] sm:$0xff]
  %v124 = vld [vmem:[%s1 + $0x118] sm:$0xff]
  %v125 = vld [vmem:[%s1 + $0x120] sm:$0xff]
  %v126 = vld [vmem:[%s1 + $0x128] sm:$0xff]
  %v127 = vld [vmem:[%s1 + $0x130] sm:$0xff]
  %v128 = vld [vmem:[%s1 + $0x138] sm:$0xff]
  %v129 = vld [vmem:[%s1 + $0x140] sm:$0xff]
  %v130 = vld [vmem:[%s1 + $0x148] sm:$0xff]
  %v131 = vld [vmem:[%s1 + $0x150] sm:$0xff]
  %v132 = vld [vmem:[%s1 + $0x158] sm:$0xff]
  %v133 = vld [vmem:[%s1 + $0x160] sm:$0xff]
  %v134 = vld [vmem:[%s1 + $0x168] sm:$0xff]
  %v135 = vld [vmem:[%s1 + $0x170] sm:$0xff]
  %v136 = vld [vmem:[%s1 + $0x178] sm:$0xff]
  %v137 = vld [vmem:[%s1 + $0x180] sm:$0xff]
  %v138 = vld [vmem:[%s1 + $0x188] sm:$0xff]
  %v139 = vld [vmem:[%s1 + $0x190] sm:$0xff]
  %v140 = vld [vmem:[%s1 + $0x198] sm:$0xff]
  %v141 = vld [vmem:[%s1 + $0x1a0] sm:$0xff]
  %v142 = vld [vmem:[%s1 + $0x1a8] sm:$0xff]
  %v143 = vld [vmem:[%s1 + $0x1b0] sm:$0xff]
  %v144 = vld [vmem:[%s1 + $0x1b8] sm:$0xff]
  %v145 = vld [vmem:[%s1 + $0x1c0] sm:$0xff]
  %v146 = vld [vmem:[%s1 + $0x1c8] sm:$0xff]
  %v147 = vld [vmem:[%s1 + $0x1d0] sm:$0xff]
  %v148 = vld [vmem:[%s1 + $0x1d8] sm:$0xff]
  %v149 = vld [vmem:[%s1 + $0x1e0] sm:$0xff]
  %v150 = vld [vmem:[%s1 + $0x1e8] sm:$0xff]
  %v151 = vld [vmem:[%s1 + $0x1f0] sm:$0xff]
  %v152 = vld [vmem:[%s1 + $0x1f8] sm:$0xff]
  %v153 = vld [vmem:[%s1 + $0x200] sm:$0xff]
  %v154 = vld [vmem:[%s1 + $0x208] sm:$0xff]
  %v155 = vld [vmem:[%s1 + $0x210] sm:$0xff]
  %v156 = vld [vmem:[%s1 + $0x218] sm:$0xff]
  %v157 = vld [vmem:[%s1 + $0x220] sm:$0xff]
  %v158 = vld [vmem:[%s1 + $0x228] sm:$0xff]
  %v159 = vld [vmem:[%s1 + $0x230] sm:$0xff]
  %v160 = vld [vmem:[%s1 + $0x238] sm:$0xff]
  %v161 = vld [vmem:[%s1 + $0x240] sm:$0xff]
  %v162 = vld [vmem:[%s1 + $0x248] sm:$0xff]
  %v163 = vld [vmem:[%s1 + $0x250] sm:$0xff]
  %v164 = vld [vmem:[%s1 + $0x258] sm:$0xff]
  %v165 = vld [vmem:[%s1 + $0x260] sm:$0xff]
  %v166 = vld [vmem:[%s1 + $0x268] sm:$0xff]
  %v167 = vld [vmem:[%s1 + $0x270] sm:$0xff]
  %v168 = vld [vmem:[%s1 + $0x278] sm:$0xff]
  %v169 = vld [vmem:[%s1 + $0x280] sm:$0xff]
  %v170 = vld [vmem:[%s1 + $0x288] sm:$0xff]
  %v171 = vld [vmem:[%s1 + $0x290] sm:$0xff]
  %v172 = vld [vmem:[%s1 + $0x298] sm:$0xff]
  %v173 = vld [vmem:[%s1 + $0x2a0] sm:$0xff]
  %v174 = vld [vmem:[%s1 + $0x2a8] sm:$0xff]
  %v175 = vld [vmem:[%s1 + $0x2b0] sm:$0xff]
  %v176 = vld [vmem:[%s1 + $0x2b8] sm:$0xff]
  %v177 = vld [vmem:[%s1 + $0x2c0] sm:$0xff]
  %v178 = vld [vmem:[%s1 + $0x2c8] sm:$0xff]
  %v179 = vld [vmem:[%s1 + $0x2d0] sm:$0xff]
  %v180 = vld [vmem:[%s1 + $0x2d8] sm:$0xff]
  %v181 = vld [vmem:[%s1 + $0x2e0] sm:$0xff]
  %v182 = vld [vmem:[%s1 + $0x2e8] sm:$0xff]
  %v183 = vld [vmem:[%s1 + $0x2f0] sm:$0xff]
  %v184 = vld [vmem:[%s1 + $0x2f8] sm:$0xff]
  %v185 = vld [vmem:[%s1 + $0x300] sm:$0xff]
  %v186 = vld [vmem:[%s1 + $0x308] sm:$0xff]
  %v187 = vld [vmem:[%s1 + $0x310] sm:$0xff]
  %v188 = vld [vmem:[%s1 + $0x318] sm:$0xff]
  %v189 = vld [vmem:[%s1 + $0x320] sm:$0xff]
  %v190 = vld [vmem:[%s1 + $0x328] sm:$0xff]
  %v191 = vld [vmem:[%s1 + $0x330] sm:$0xff]
  %v192 = vld [vmem:[%s1 + $0x338] sm:$0xff]
  %v193 = vld [vmem:[%s1 + $0x340] sm:$0xff]
  %v194 = vld [vmem:[%s1 + $0x348] sm:$0xff]
  %v195 = vld [vmem:[%s1 + $0x350] sm:$0xff]
  %v196 = vld [vmem:[%s1 + $0x358] sm:$0xff]
  %v197 = vld [vmem:[%s1 + $0x360] sm:$0xff]
  %v198 = vld [vmem:[%s1 + $0x368] sm:$0xff]
  %v199 = vld [vmem:[%s1 + $0x370] sm:$0xff]
  %v200 = vld [vmem:[%s1 + $0x378] sm:$0xff]
  %v201 = vld [vmem:[%s1 + $0x380] sm:$0xff]
  %v202 = vld [vmem:[%s1 + $0x388] sm:$0xff]
  %v203 = vld [vmem:[%s1 + $0x390] sm:$0xff]
  %v204 = vld [vmem:[%s1 + $0x398] sm:$0xff]
  %v205 = vld [vmem:[%s1 + $0x3a0] sm:$0xff]
  %v206 = vld [vmem:[%s1 + $0x3a8] sm:$0xff]
  %v207 = vld [vmem:[%s1 + $0x3b0] sm:$0xff]
  %v208 = vld [vmem:[%s1 + $0x3b8] sm:$0xff]
  %v209 = vld [vmem:[%s1 + $0x3c0] sm:$0xff]
  %v210 = vld [vmem:[%s1 + $0x3c8] sm:$0xff]
  %v211 = vld [vmem:[%s1 + $0x3d0] sm:$0xff]
  %v212 = vld [vmem:[%s1 + $0x3d8] sm:$0xff]
  %v213 = vld [vmem:[%s1 + $0x3e0] sm:$0xff]
  %v214 = vld [vmem:[%s1 + $0x3e8] sm:$0xff]
  %v215 = vld [vmem:[%s1 + $0x3f0] sm:$0xff]
  %v216 = vld [vmem:[%s1 + $0x3f8] sm:$0xff]
  %v217 = vld [vmem:[%s1 + $0x400] sm:$0xff]
  %v218 = vld [vmem:[%s1 + $0x408] sm:$0xff]
  %v219 = vld [vmem:[%s1 + $0x410] sm:$0xff]
  %v220 = vld [vmem:[%s1 + $0x418] sm:$0xff]
  %v221 = vld [vmem:[%s1 + $0x420] sm:$0xff]
  %v222 = vld [vmem:[%s1 + $0x428] sm:$0xff]
  %v223 = vld [vmem:[%s1 + $0x430] sm:$0xff]
  %v224 = vld [vmem:[%s1 + $0x438] sm:$0xff]
  %v225 = vld [vmem:[%s1 + $0x440] sm:$0xff]
  %v226 = vld [vmem:[%s1 + $0x448] sm:$0xff]
  %v227 = vld [vmem:[%s1 + $0x450] sm:$0xff]
  %v228 = vld [vmem:[%s1 + $0x458] sm:$0xff]
  %v229 = vld [vmem:[%s1 + $0x460] sm:$0xff]
  %v230 = vld [vmem:[%s1 + $0x468] sm:$0xff]
  %v231 = vld [vmem:[%s1 + $0x470] sm:$0xff]
  %v232 = vld [vmem:[%s1 + $0x478] sm:$0xff]
  %v233 = vld [vmem:[%s1 + $0x480] sm:$0xff]
  %v234 = vld [vmem:[%s1 + $0x488] sm:$0xff]
  %v235 = vld [vmem:[%s1 + $0x490] sm:$0xff]
  %v236 = vld [vmem:[%s1 + $0x498] sm:$0xff]
  %v237 = vld [vmem:[%s1 + $0x4a0] sm:$0xff]
  %v238 = vld [vmem:[%s1 + $0x4a8] sm:$0xff]
  %v239 = vld [vmem:[%s1 + $0x4b0] sm:$0xff]
  %v240 = vld [vmem:[%s1 + $0x4b8] sm:$0xff]
  %v241 = vld [vmem:[%s1 + $0x4c0] sm:$0xff]
  %v242 = vld [vmem:[%s1 + $0x4c8] sm:$0xff]
  %v243 = vld [vmem:[%s1 + $0x4d0] sm:$0xff]
  %v244 = vld [vmem:[%s1 + $0x4d8] sm:$0xff]
  %v245 = vld [vmem:[%s1 + $0x4e0] sm:$0xff]
  %v246 = vld [vmem:[%s1 + $0x4e8] sm:$0xff]
  %v247 = vld [vmem:[%s1 + $0x4f0] sm:$0xff]
  %v248 = vld [vmem:[%s1 + $0x4f8] sm:$0xff]
  %v249 = vld [vmem:[%s1 + $0x500] sm:$0xff]
  %v250 = vld [vmem:[%s1 + $0x508] sm:$0xff]
  %v251 = vld [vmem:[%s1 + $0x510] sm:$0xff]
  %v252 = vld [vmem:[%s1 + $0x518] sm:$0xff]
  %v253 = vld [vmem:[%s1 + $0x520] sm:$0xff]
  %v254 = vld [vmem:[%s1 + $0x528] sm:$0xff]
  %v255 = vld [vmem:[%s1 + $0x530] sm:$0xff]
  %v256 = vld [vmem:[%s1 + $0x538] sm:$0xff]
  %v257 = vld [vmem:[%s1 + $0x540] sm:$0xff]
  %v258 = vld [vmem:[%s1 + $0x548] sm:$0xff]
  %v259 = vld [vmem:[%s1 + $0x550] sm:$0xff]
  %v260 = vld [vmem:[%s1 + $0x558] sm:$0xff]
  %v261 = vld [vmem:[%s1 + $0x560] sm:$0xff]
  %v262 = vld [vmem:[%s1 + $0x568] sm:$0xff]
  %v263 = vld [vmem:[%s1 + $0x570] sm:$0xff]
  %v264 = vld [vmem:[%s1 + $0x578] sm:$0xff]
  %v265 = vld [vmem:[%s1 + $0x580] sm:$0xff]
  %v266 = vld [vmem:[%s1 + $0x588] sm:$0xff]
  %v267 = vld [vmem:[%s1 + $0x590] sm:$0xff]
  %v268 = vld [vmem:[%s1 + $0x598] sm:$0xff]
  %v269 = vld [vmem:[%s1 + $0x5a0] sm:$0xff]
  %v270 = vld [vmem:[%s1 + $0x5a8] sm:$0xff]
  %v271 = vld [vmem:[%s1 + $0x5b0] sm:$0xff]
  %v272 = vld [vmem:[%s1 + $0x5b8] sm:$0xff]
  %v273 = vld [vmem:[%s1 + $0x5c0] sm:$0xff]
  %v274 = vld [vmem:[%s1 + $0x5c8] sm:$0xff]
  %v275 = vld [vmem:[%s1 + $0x5d0] sm:$0xff]
  %v276 = vld [vmem:[%s1 + $0x5d8] sm:$0xff]
  %v277 = vld [vmem:[%s1 + $0x5e0] sm:$0xff]
  %v278 = vld [vmem:[%s1 + $0x5e8] sm:$0xff]
  %v279 = vld [vmem:[%s1 + $0x5f0] sm:$0xff]
  %v280 = vld [vmem:[%s1 + $0x5f8] sm:$0xff]
  %v281 = vld [vmem:[%s1 + $0x600] sm:$0xff]
  %v282 = vld [vmem:[%s1 + $0x608] sm:$0xff]
  %v283 = vld [vmem:[%s1 + $0x610] sm:$0xff]
  %v284 = vld [vmem:[%s1 + $0x618] sm:$0xff]
  %v285 = vld [vmem:[%s1 + $0x620] sm:$0xff]
  %v286 = vld [vmem:[%s1 + $0x628] sm:$0xff]
  %v287 = vld [vmem:[%s1 + $0x630] sm:$0xff]
  %v288 = vld [vmem:[%s1 + $0x638] sm:$0xff]
  %v289 = vld [vmem:[%s1 + $0x640] sm:$0xff]
  %v290 = vld [vmem:[%s1 + $0x648] sm:$0xff]
  %v291 = vld [vmem:[%s1 + $0x650] sm:$0xff]
  %v292 = vld [vmem:[%s1 + $0x658] sm:$0xff]
  %v293 = vld [vmem:[%s1 + $0x660] sm:$0xff]
  %v294 = vld [vmem:[%s1 + $0x668] sm:$0xff]
  %v295 = vld [vmem:[%s1 + $0x670] sm:$0xff]
  %v296 = vld [vmem:[%s1 + $0x678] sm:$0xff]
  %v297 = vld [vmem:[%s1 + $0x680] sm:$0xff]
  %v298 = vld [vmem:[%s1 + $0x688] sm:$0xff]
  %v299 = vld [vmem:[%s1 + $0x690] sm:$0xff]
  %v300 = vld [vmem:[%s1 + $0x698] sm:$0xff]
  %v301 = vld [vmem:[%s1 + $0x6a0] sm:$0xff]
  %v302 = vld [vmem:[%s1 + $0x6a8] sm:$0xff]
  %v303 = vld [vmem:[%s1 + $0x6b0] sm:$0xff]
  %v304 = vld [vmem:[%s1 + $0x6b8] sm:$0xff]
  %v305 = vld [vmem:[%s1 + $0x6c0] sm:$0xff]
  %v306 = vld [vmem:[%s1 + $0x6c8] sm:$0xff]
  %v307 = vld [vmem:[%s1 + $0x6d0] sm:$0xff]
  %v308 = vld [vmem:[%s1 + $0x6d8] sm:$0xff]
  %v309 = vld [vmem:[%s1 + $0x6e0] sm:$0xff]
  %v310 = vld [vmem:[%s1 + $0x6e8] sm:$0xff]
  %v311 = vld [vmem:[%s1 + $0x6f0] sm:$0xff]
  %v312 = vld [vmem:[%s1 + $0x6f8] sm:$0xff]
  %v313 = vld [vmem:[%s1 + $0x700] sm:$0xff]
  %v314 = vld [vmem:[%s1 + $0x708] sm:$0xff]
  %v315 = vld [vmem:[%s1 + $0x710] sm:$0xff]
  %v316 = vld [vmem:[%s1 + $0x718] sm:$0xff]
  %v317 = vld [vmem:[%s1 + $0x720] sm:$0xff]
  %v318 = vld [vmem:[%s1 + $0x728] sm:$0xff]
  %v319 = vld [vmem:[%s1 + $0x730] sm:$0xff]
  %v320 = vld [vmem:[%s1 + $0x738] sm:$0xff]
  %v321 = vld [vmem:[%s1 + $0x740] sm:$0xff]
  %v322 = vld [vmem:[%s1 + $0x748] sm:$0xff]
  %v323 = vld [vmem:[%s1 + $0x750] sm:$0xff]
  %v324 = vld [vmem:[%s1 + $0x758] sm:$0xff]
  %v325 = vld [vmem:[%s1 + $0x760] sm:$0xff]
  %v326 = vld [vmem:[%s1 + $0x768] sm:$0xff]
  %v327 = vld [vmem:[%s1 + $0x770] sm:$0xff]
  %v328 = vld [vmem:[%s1 + $0x778] sm:$0xff]
  %v329 = vld [vmem:[%s1 + $0x780] sm:$0xff]
  %v330 = vld [vmem:[%s1 + $0x788] sm:$0xff]
  %v331 = vld [vmem:[%s1 + $0x790] sm:$0xff]
  %v332 = vld [vmem:[%s1 + $0x798] sm:$0xff]
  %v333 = vld [vmem:[%s1 + $0x7a0] sm:$0xff]
  %v334 = vld [vmem:[%s1 + $0x7a8] sm:$0xff]
  %v335 = vld [vmem:[%s1 + $0x7b0] sm:$0xff]
  %v336 = vld [vmem:[%s1 + $0x7b8] sm:$0xff]
  %v337 = vld [vmem:[%s1 + $0x7c0] sm:$0xff]
  %v338 = vld [vmem:[%s1 + $0x7c8] sm:$0xff]
  %v339 = vld [vmem:[%s1 + $0x7d0] sm:$0xff]
  %v340 = vld [vmem:[%s1 + $0x7d8] sm:$0xff]
  %v341 = vld [vmem:[%s1 + $0x7e0] sm:$0xff]
  %v342 = vld [vmem:[%s1 + $0x7e8] sm:$0xff]
  %v343 = vld [vmem:[%s1 + $0x7f0] sm:$0xff]
  %v344 = vld [vmem:[%s1 + $0x7f8] sm:$0xff]
  %v345 = vld [vmem:[%s1 + $0x800] sm:$0xff]
  %v346 = vld [vmem:[%s1 + $0x808] sm:$0xff]
  %v347 = vld [vmem:[%s1 + $0x810] sm:$0xff]
  %v348 = vld [vmem:[%s1 + $0x818] sm:$0xff]
  %v349 = vld [vmem:[%s1 + $0x820] sm:$0xff]
  %v350 = vld [vmem:[%s1 + $0x828] sm:$0xff]
  %v351 = vld [vmem:[%s1 + $0x830] sm:$0xff]
  %v352 = vld [vmem:[%s1 + $0x838] sm:$0xff]
  %v353 = vld [vmem:[%s1 + $0x840] sm:$0xff]
  %v354 = vld [vmem:[%s1 + $0x848] sm:$0xff]
  %v355 = vld [vmem:[%s1 + $0x850] sm:$0xff]
  %v356 = vld [vmem:[%s1 + $0x858] sm:$0xff]
  %v357 = vld [vmem:[%s1 + $0x860] sm:$0xff]
  %v358 = vld [vmem:[%s1 + $0x868] sm:$0xff]
  %v359 = vld [vmem:[%s1 + $0x870] sm:$0xff]
  %v360 = vld [vmem:[%s1 + $0x878] sm:$0xff]
  %v361 = vld [vmem:[%s1 + $0x880] sm:$0xff]
  %v362 = vld [vmem:[%s1 + $0x888] sm:$0xff]
  %v363 = vld [vmem:[%s1 + $0x890] sm:$0xff]
  %v364 = vld [vmem:[%s1 + $0x898] sm:$0xff]
  %v365 = vld [vmem:[%s1 + $0x8a0] sm:$0xff]
  %v366 = vld [vmem:[%s1 + $0x8a8] sm:$0xff]
  %v367 = vld [vmem:[%s1 + $0x8b0] sm:$0xff]
  %v368 = vld [vmem:[%s1 + $0x8b8] sm:$0xff]
  %v369 = vld [vmem:[%s1 + $0x8c0] sm:$0xff]
  %v370 = vld [vmem:[%s1 + $0x8c8] sm:$0xff]
  %v371 = vld [vmem:[%s1 + $0x8d0] sm:$0xff]
  %v372 = vld [vmem:[%s1 + $0x8d8] sm:$0xff]
  %v373 = vld [vmem:[%s1 + $0x8e0] sm:$0xff]
  %v374 = vld [vmem:[%s1 + $0x8e8] sm:$0xff]
  %v375 = vld [vmem:[%s1 + $0x8f0] sm:$0xff]
  %v376 = vld [vmem:[%s1 + $0x8f8] sm:$0xff]
  %377 = vmatpush.msra.mxu0 %v119
  %378 = vmatpush.msra.mxu0 %v117
  %379 = vmatpush.msra.mxu0 %v115
  %380 = vmatpush.msra.mxu0 %v113
  %381 = vmatpush.msra.mxu0 %v111
  %382 = vmatpush.msra.mxu0 %v109
  %383 = vmatpush.msra.mxu0 %v107
  %384 = vmatpush.msra.mxu0 %v105
  %385 = vmatpush.msra.mxu0 %v103
  %386 = vmatpush.msra.mxu0 %v101
  %387 = vmatpush.msra.mxu0 %v99
  %388 = vmatpush.msra.mxu0 %v97
  %389 = vmatpush.msra.mxu0 %v95
  %390 = vmatpush.msra.mxu0 %v93
  %391 = vmatpush.msra.mxu0 %v91
  %392 = vmatpush.msra.mxu0 %v89
  %393 = vmatmul.f32.gmra.mxu0 %v53
  %v394 = vpop.f32.mrf.mxu0
  %v395 = vadd.f32 0.0, %v394
  %396 = vmatmul.f32.gmra.mxu0 %v62
  %v397 = vpop.f32.mrf.mxu0
  %v398 = vadd.f32 0.0, %v397
  %399 = vmatmul.f32.gmra.mxu0 %v71
  %v400 = vpop.f32.mrf.mxu0
  %v401 = vadd.f32 0.0, %v400
  %402 = vmatmul.f32.gmra.mxu0 %v80
  %v403 = vpop.f32.mrf.mxu0
  %v404 = vadd.f32 0.0, %v403
  %405 = vdwg.mxu0
  %406 = vmatpush.msra.mxu0 %v151
  %407 = vmatpush.msra.mxu0 %v149
  %408 = vmatpush.msra.mxu0 %v147
  %409 = vmatpush.msra.mxu0 %v145
  %410 = vmatpush.msra.mxu0 %v143
  %411 = vmatpush.msra.mxu0 %v141
  %412 = vmatpush.msra.mxu0 %v139
  %413 = vmatpush.msra.mxu0 %v137
  %414 = vmatpush.msra.mxu0 %v135
  %415 = vmatpush.msra.mxu0 %v133
  %416 = vmatpush.msra.mxu0 %v131
  %417 = vmatpush.msra.mxu0 %v129
  %418 = vmatpush.msra.mxu0 %v127
  %419 = vmatpush.msra.mxu0 %v125
  %420 = vmatpush.msra.mxu0 %v123
  %421 = vmatpush.msra.mxu0 %v121
  %422 = vmatmul.f32.gmra.mxu0 %v54
  %v423 = vpop.f32.mrf.mxu0
  %v424 = vadd.f32 %v395, %v423
  %425 = vmatmul.f32.gmra.mxu0 %v63
  %v426 = vpop.f32.mrf.mxu0
  %v427 = vadd.f32 %v398, %v426
  %428 = vmatmul.f32.gmra.mxu0 %v72
  %v429 = vpop.f32.mrf.mxu0
  %v430 = vadd.f32 %v401, %v429
  %431 = vmatmul.f32.gmra.mxu0 %v81
  %v432 = vpop.f32.mrf.mxu0
  %v433 = vadd.f32 %v404, %v432
  %434 = vdwg.mxu0
  %435 = vmatpush.msra.mxu0 %v183
  %436 = vmatpush.msra.mxu0 %v181
  %437 = vmatpush.msra.mxu0 %v179
  %438 = vmatpush.msra.mxu0 %v177
  %439 = vmatpush.msra.mxu0 %v175
  %440 = vmatpush.msra.mxu0 %v173
  %441 = vmatpush.msra.mxu0 %v171
  %442 = vmatpush.msra.mxu0 %v169
  %443 = vmatpush.msra.mxu0 %v167
  %444 = vmatpush.msra.mxu0 %v165
  %445 = vmatpush.msra.mxu0 %v163
  %446 = vmatpush.msra.mxu0 %v161
  %447 = vmatpush.msra.mxu0 %v159
  %448 = vmatpush.msra.mxu0 %v157
  %449 = vmatpush.msra.mxu0 %v155
  %450 = vmatpush.msra.mxu0 %v153
  %451 = vmatmul.f32.gmra.mxu0 %v55
  %v452 = vpop.f32.mrf.mxu0
  %v453 = vadd.f32 %v424, %v452
  %454 = vmatmul.f32.gmra.mxu0 %v64
  %v455 = vpop.f32.mrf.mxu0
  %v456 = vadd.f32 %v427, %v455
  %457 = vmatmul.f32.gmra.mxu0 %v73
  %v458 = vpop.f32.mrf.mxu0
  %v459 = vadd.f32 %v430, %v458
  %460 = vmatmul.f32.gmra.mxu0 %v82
  %v461 = vpop.f32.mrf.mxu0
  %v462 = vadd.f32 %v433, %v461
  %463 = vdwg.mxu0
  %464 = vmatpush.msra.mxu0 %v215
  %465 = vmatpush.msra.mxu0 %v213
  %466 = vmatpush.msra.mxu0 %v211
  %467 = vmatpush.msra.mxu0 %v209
  %468 = vmatpush.msra.mxu0 %v207
  %469 = vmatpush.msra.mxu0 %v205
  %470 = vmatpush.msra.mxu0 %v203
  %471 = vmatpush.msra.mxu0 %v201
  %472 = vmatpush.msra.mxu0 %v199
  %473 = vmatpush.msra.mxu0 %v197
  %474 = vmatpush.msra.mxu0 %v195
  %475 = vmatpush.msra.mxu0 %v193
  %476 = vmatpush.msra.mxu0 %v191
  %477 = vmatpush.msra.mxu0 %v189
  %478 = vmatpush.msra.mxu0 %v187
  %479 = vmatpush.msra.mxu0 %v185
  %480 = vmatmul.f32.gmra.mxu0 %v56
  %v481 = vpop.f32.mrf.mxu0
  %v482 = vadd.f32 %v453, %v481
  %483 = vmatmul.f32.gmra.mxu0 %v65
  %v484 = vpop.f32.mrf.mxu0
  %v485 = vadd.f32 %v456, %v484
  %486 = vmatmul.f32.gmra.mxu0 %v74
  %v487 = vpop.f32.mrf.mxu0
  %v488 = vadd.f32 %v459, %v487
  %489 = vmatmul.f32.gmra.mxu0 %v83
  %v490 = vpop.f32.mrf.mxu0
  %v491 = vadd.f32 %v462, %v490
  %492 = vdwg.mxu0
  %493 = vmatpush.msra.mxu0 %v247
  %494 = vmatpush.msra.mxu0 %v245
  %495 = vmatpush.msra.mxu0 %v243
  %496 = vmatpush.msra.mxu0 %v241
  %497 = vmatpush.msra.mxu0 %v239
  %498 = vmatpush.msra.mxu0 %v237
  %499 = vmatpush.msra.mxu0 %v235
  %500 = vmatpush.msra.mxu0 %v233
  %501 = vmatpush.msra.mxu0 %v231
  %502 = vmatpush.msra.mxu0 %v229
  %503 = vmatpush.msra.mxu0 %v227
  %504 = vmatpush.msra.mxu0 %v225
  %505 = vmatpush.msra.mxu0 %v223
  %506 = vmatpush.msra.mxu0 %v221
  %507 = vmatpush.msra.mxu0 %v219
  %508 = vmatpush.msra.mxu0 %v217
  %509 = vmatmul.f32.gmra.mxu0 %v57
  %v510 = vpop.f32.mrf.mxu0
  %v511 = vadd.f32 %v482, %v510
  %512 = vmatmul.f32.gmra.mxu0 %v66
  %v513 = vpop.f32.mrf.mxu0
  %v514 = vadd.f32 %v485, %v513
  %515 = vmatmul.f32.gmra.mxu0 %v75
  %v516 = vpop.f32.mrf.mxu0
  %v517 = vadd.f32 %v488, %v516
  %518 = vmatmul.f32.gmra.mxu0 %v84
  %v519 = vpop.f32.mrf.mxu0
  %v520 = vadd.f32 %v491, %v519
  %521 = vdwg.mxu0
  %522 = vmatpush.msra.mxu0 %v279
  %523 = vmatpush.msra.mxu0 %v277
  %524 = vmatpush.msra.mxu0 %v275
  %525 = vmatpush.msra.mxu0 %v273
  %526 = vmatpush.msra.mxu0 %v271
  %527 = vmatpush.msra.mxu0 %v269
  %528 = vmatpush.msra.mxu0 %v267
  %529 = vmatpush.msra.mxu0 %v265
  %530 = vmatpush.msra.mxu0 %v263
  %531 = vmatpush.msra.mxu0 %v261
  %532 = vmatpush.msra.mxu0 %v259
  %533 = vmatpush.msra.mxu0 %v257
  %534 = vmatpush.msra.mxu0 %v255
  %535 = vmatpush.msra.mxu0 %v253
  %536 = vmatpush.msra.mxu0 %v251
  %537 = vmatpush.msra.mxu0 %v249
  %538 = vmatmul.f32.gmra.mxu0 %v58
  %v539 = vpop.f32.mrf.mxu0
  %v540 = vadd.f32 %v511, %v539
  %541 = vmatmul.f32.gmra.mxu0 %v67
  %v542 = vpop.f32.mrf.mxu0
  %v543 = vadd.f32 %v514, %v542
  %544 = vmatmul.f32.gmra.mxu0 %v76
  %v545 = vpop.f32.mrf.mxu0
  %v546 = vadd.f32 %v517, %v545
  %547 = vmatmul.f32.gmra.mxu0 %v85
  %v548 = vpop.f32.mrf.mxu0
  %v549 = vadd.f32 %v520, %v548
  %550 = vdwg.mxu0
  %551 = vmatpush.msra.mxu0 %v311
  %552 = vmatpush.msra.mxu0 %v309
  %553 = vmatpush.msra.mxu0 %v307
  %554 = vmatpush.msra.mxu0 %v305
  %555 = vmatpush.msra.mxu0 %v303
  %556 = vmatpush.msra.mxu0 %v301
  %557 = vmatpush.msra.mxu0 %v299
  %558 = vmatpush.msra.mxu0 %v297
  %559 = vmatpush.msra.mxu0 %v295
  %560 = vmatpush.msra.mxu0 %v293
  %561 = vmatpush.msra.mxu0 %v291
  %562 = vmatpush.msra.mxu0 %v289
  %563 = vmatpush.msra.mxu0 %v287
  %564 = vmatpush.msra.mxu0 %v285
  %565 = vmatpush.msra.mxu0 %v283
  %566 = vmatpush.msra.mxu0 %v281
  %567 = vmatmul.f32.gmra.mxu0 %v59
  %v568 = vpop.f32.mrf.mxu0
  %v569 = vadd.f32 %v540, %v568
  %570 = vmatmul.f32.gmra.mxu0 %v68
  %v571 = vpop.f32.mrf.mxu0
  %v572 = vadd.f32 %v543, %v571
  %573 = vmatmul.f32.gmra.mxu0 %v77
  %v574 = vpop.f32.mrf.mxu0
  %v575 = vadd.f32 %v546, %v574
  %576 = vmatmul.f32.gmra.mxu0 %v86
  %v577 = vpop.f32.mrf.mxu0
  %v578 = vadd.f32 %v549, %v577
  %579 = vdwg.mxu0
  %580 = vmatpush.msra.mxu0 %v343
  %581 = vmatpush.msra.mxu0 %v341
  %582 = vmatpush.msra.mxu0 %v339
  %583 = vmatpush.msra.mxu0 %v337
  %584 = vmatpush.msra.mxu0 %v335
  %585 = vmatpush.msra.mxu0 %v333
  %586 = vmatpush.msra.mxu0 %v331
  %587 = vmatpush.msra.mxu0 %v329
  %588 = vmatpush.msra.mxu0 %v327
  %589 = vmatpush.msra.mxu0 %v325
  %590 = vmatpush.msra.mxu0 %v323
  %591 = vmatpush.msra.mxu0 %v321
  %592 = vmatpush.msra.mxu0 %v319
  %593 = vmatpush.msra.mxu0 %v317
  %594 = vmatpush.msra.mxu0 %v315
  %595 = vmatpush.msra.mxu0 %v313
  %596 = vmatmul.f32.gmra.mxu0 %v60
  %v597 = vpop.f32.mrf.mxu0
  %v598 = vadd.f32 %v569, %v597
  %599 = vmatmul.f32.gmra.mxu0 %v69
  %v600 = vpop.f32.mrf.mxu0
  %v601 = vadd.f32 %v572, %v600
  %602 = vmatmul.f32.gmra.mxu0 %v78
  %v603 = vpop.f32.mrf.mxu0
  %v604 = vadd.f32 %v575, %v603
  %605 = vmatmul.f32.gmra.mxu0 %v87
  %v606 = vpop.f32.mrf.mxu0
  %v607 = vadd.f32 %v578, %v606
  %608 = vdwg.mxu0
  %609 = vmatpush.msra.mxu0 %v375
  %610 = vmatpush.msra.mxu0 %v373
  %611 = vmatpush.msra.mxu0 %v371
  %612 = vmatpush.msra.mxu0 %v369
  %613 = vmatpush.msra.mxu0 %v367
  %614 = vmatpush.msra.mxu0 %v365
  %615 = vmatpush.msra.mxu0 %v363
  %616 = vmatpush.msra.mxu0 %v361
  %617 = vmatpush.msra.mxu0 %v359
  %618 = vmatpush.msra.mxu0 %v357
  %619 = vmatpush.msra.mxu0 %v355
  %620 = vmatpush.msra.mxu0 %v353
  %621 = vmatpush.msra.mxu0 %v351
  %622 = vmatpush.msra.mxu0 %v349
  %623 = vmatpush.msra.mxu0 %v347
  %624 = vmatpush.msra.mxu0 %v345
  %625 = vmatmul.f32.gmra.mxu0 %v61
  %v626 = vpop.f32.mrf.mxu0
  %v627 = vadd.f32 %v598, %v626
  %628 = vmatmul.f32.gmra.mxu0 %v70
  %v629 = vpop.f32.mrf.mxu0
  %v630 = vadd.f32 %v601, %v629
  %631 = vmatmul.f32.gmra.mxu0 %v79
  %v632 = vpop.f32.mrf.mxu0
  %v633 = vadd.f32 %v604, %v632
  %634 = vmatmul.f32.gmra.mxu0 %v88
  %v635 = vpop.f32.mrf.mxu0
  %v636 = vadd.f32 %v607, %v635
  %637 = vdwg.mxu0
  %638 = vmatpush.msra.mxu0 %v120
  %639 = vmatpush.msra.mxu0 %v118
  %640 = vmatpush.msra.mxu0 %v116
  %641 = vmatpush.msra.mxu0 %v114
  %642 = vmatpush.msra.mxu0 %v112
  %643 = vmatpush.msra.mxu0 %v110
  %644 = vmatpush.msra.mxu0 %v108
  %645 = vmatpush.msra.mxu0 %v106
  %646 = vmatpush.msra.mxu0 %v104
  %647 = vmatpush.msra.mxu0 %v102
  %648 = vmatpush.msra.mxu0 %v100
  %649 = vmatpush.msra.mxu0 %v98
  %650 = vmatpush.msra.mxu0 %v96
  %651 = vmatpush.msra.mxu0 %v94
  %652 = vmatpush.msra.mxu0 %v92
  %653 = vmatpush.msra.mxu0 %v90
  %654 = vmatmul.f32.gmra.mxu0 %v53
  %v655 = vpop.f32.mrf.mxu0
  %v656 = vadd.f32 0.0, %v655
  %657 = vmatmul.f32.gmra.mxu0 %v62
  %v658 = vpop.f32.mrf.mxu0
  %v659 = vadd.f32 0.0, %v658
  %660 = vmatmul.f32.gmra.mxu0 %v71
  %v661 = vpop.f32.mrf.mxu0
  %v662 = vadd.f32 0.0, %v661
  %663 = vmatmul.f32.gmra.mxu0 %v80
  %v664 = vpop.f32.mrf.mxu0
  %v665 = vadd.f32 0.0, %v664
  %666 = vdwg.mxu0
  %667 = vmatpush.msra.mxu0 %v152
  %668 = vmatpush.msra.mxu0 %v150
  %669 = vmatpush.msra.mxu0 %v148
  %670 = vmatpush.msra.mxu0 %v146
  %671 = vmatpush.msra.mxu0 %v144
  %672 = vmatpush.msra.mxu0 %v142
  %673 = vmatpush.msra.mxu0 %v140
  %674 = vmatpush.msra.mxu0 %v138
  %675 = vmatpush.msra.mxu0 %v136
  %676 = vmatpush.msra.mxu0 %v134
  %677 = vmatpush.msra.mxu0 %v132
  %678 = vmatpush.msra.mxu0 %v130
  %679 = vmatpush.msra.mxu0 %v128
  %680 = vmatpush.msra.mxu0 %v126
  %681 = vmatpush.msra.mxu0 %v124
  %682 = vmatpush.msra.mxu0 %v122
  %683 = vmatmul.f32.gmra.mxu0 %v54
  %v684 = vpop.f32.mrf.mxu0
  %v685 = vadd.f32 %v656, %v684
  %686 = vmatmul.f32.gmra.mxu0 %v63
  %v687 = vpop.f32.mrf.mxu0
  %v688 = vadd.f32 %v659, %v687
  %689 = vmatmul.f32.gmra.mxu0 %v72
  %v690 = vpop.f32.mrf.mxu0
  %v691 = vadd.f32 %v662, %v690
  %692 = vmatmul.f32.gmra.mxu0 %v81
  %v693 = vpop.f32.mrf.mxu0
  %v694 = vadd.f32 %v665, %v693
  %695 = vdwg.mxu0
  %696 = vmatpush.msra.mxu0 %v184
  %697 = vmatpush.msra.mxu0 %v182
  %698 = vmatpush.msra.mxu0 %v180
  %699 = vmatpush.msra.mxu0 %v178
  %700 = vmatpush.msra.mxu0 %v176
  %701 = vmatpush.msra.mxu0 %v174
  %702 = vmatpush.msra.mxu0 %v172
  %703 = vmatpush.msra.mxu0 %v170
  %704 = vmatpush.msra.mxu0 %v168
  %705 = vmatpush.msra.mxu0 %v166
  %706 = vmatpush.msra.mxu0 %v164
  %707 = vmatpush.msra.mxu0 %v162
  %708 = vmatpush.msra.mxu0 %v160
  %709 = vmatpush.msra.mxu0 %v158
  %710 = vmatpush.msra.mxu0 %v156
  %711 = vmatpush.msra.mxu0 %v154
  %712 = vmatmul.f32.gmra.mxu0 %v55
  %v713 = vpop.f32.mrf.mxu0
  %v714 = vadd.f32 %v685, %v713
  %715 = vmatmul.f32.gmra.mxu0 %v64
  %v716 = vpop.f32.mrf.mxu0
  %v717 = vadd.f32 %v688, %v716
  %718 = vmatmul.f32.gmra.mxu0 %v73
  %v719 = vpop.f32.mrf.mxu0
  %v720 = vadd.f32 %v691, %v719
  %721 = vmatmul.f32.gmra.mxu0 %v82
  %v722 = vpop.f32.mrf.mxu0
  %v723 = vadd.f32 %v694, %v722
  %724 = vdwg.mxu0
  %725 = vmatpush.msra.mxu0 %v216
  %726 = vmatpush.msra.mxu0 %v214
  %727 = vmatpush.msra.mxu0 %v212
  %728 = vmatpush.msra.mxu0 %v210
  %729 = vmatpush.msra.mxu0 %v208
  %730 = vmatpush.msra.mxu0 %v206
  %731 = vmatpush.msra.mxu0 %v204
  %732 = vmatpush.msra.mxu0 %v202
  %733 = vmatpush.msra.mxu0 %v200
  %734 = vmatpush.msra.mxu0 %v198
  %735 = vmatpush.msra.mxu0 %v196
  %736 = vmatpush.msra.mxu0 %v194
  %737 = vmatpush.msra.mxu0 %v192
  %738 = vmatpush.msra.mxu0 %v190
  %739 = vmatpush.msra.mxu0 %v188
  %740 = vmatpush.msra.mxu0 %v186
  %741 = vmatmul.f32.gmra.mxu0 %v56
  %v742 = vpop.f32.mrf.mxu0
  %v743 = vadd.f32 %v714, %v742
  %744 = vmatmul.f32.gmra.mxu0 %v65
  %v745 = vpop.f32.mrf.mxu0
  %v746 = vadd.f32 %v717, %v745
  %747 = vmatmul.f32.gmra.mxu0 %v74
  %v748 = vpop.f32.mrf.mxu0
  %v749 = vadd.f32 %v720, %v748
  %750 = vmatmul.f32.gmra.mxu0 %v83
  %v751 = vpop.f32.mrf.mxu0
  %v752 = vadd.f32 %v723, %v751
  %753 = vdwg.mxu0
  %754 = vmatpush.msra.mxu0 %v248
  %755 = vmatpush.msra.mxu0 %v246
  %756 = vmatpush.msra.mxu0 %v244
  %757 = vmatpush.msra.mxu0 %v242
  %758 = vmatpush.msra.mxu0 %v240
  %759 = vmatpush.msra.mxu0 %v238
  %760 = vmatpush.msra.mxu0 %v236
  %761 = vmatpush.msra.mxu0 %v234
  %762 = vmatpush.msra.mxu0 %v232
  %763 = vmatpush.msra.mxu0 %v230
  %764 = vmatpush.msra.mxu0 %v228
  %765 = vmatpush.msra.mxu0 %v226
  %766 = vmatpush.msra.mxu0 %v224
  %767 = vmatpush.msra.mxu0 %v222
  %768 = vmatpush.msra.mxu0 %v220
  %769 = vmatpush.msra.mxu0 %v218
  %770 = vmatmul.f32.gmra.mxu0 %v57
  %v771 = vpop.f32.mrf.mxu0
  %v772 = vadd.f32 %v743, %v771
  %773 = vmatmul.f32.gmra.mxu0 %v66
  %v774 = vpop.f32.mrf.mxu0
  %v775 = vadd.f32 %v746, %v774
  %776 = vmatmul.f32.gmra.mxu0 %v75
  %v777 = vpop.f32.mrf.mxu0
  %v778 = vadd.f32 %v749, %v777
  %779 = vmatmul.f32.gmra.mxu0 %v84
  %v780 = vpop.f32.mrf.mxu0
  %v781 = vadd.f32 %v752, %v780
  %782 = vdwg.mxu0
  %783 = vmatpush.msra.mxu0 %v280
  %784 = vmatpush.msra.mxu0 %v278
  %785 = vmatpush.msra.mxu0 %v276
  %786 = vmatpush.msra.mxu0 %v274
  %787 = vmatpush.msra.mxu0 %v272
  %788 = vmatpush.msra.mxu0 %v270
  %789 = vmatpush.msra.mxu0 %v268
  %790 = vmatpush.msra.mxu0 %v266
  %791 = vmatpush.msra.mxu0 %v264
  %792 = vmatpush.msra.mxu0 %v262
  %793 = vmatpush.msra.mxu0 %v260
  %794 = vmatpush.msra.mxu0 %v258
  %795 = vmatpush.msra.mxu0 %v256
  %796 = vmatpush.msra.mxu0 %v254
  %797 = vmatpush.msra.mxu0 %v252
  %798 = vmatpush.msra.mxu0 %v250
  %799 = vmatmul.f32.gmra.mxu0 %v58
  %v800 = vpop.f32.mrf.mxu0
  %v801 = vadd.f32 %v772, %v800
  %802 = vmatmul.f32.gmra.mxu0 %v67
  %v803 = vpop.f32.mrf.mxu0
  %v804 = vadd.f32 %v775, %v803
  %805 = vmatmul.f32.gmra.mxu0 %v76
  %v806 = vpop.f32.mrf.mxu0
  %v807 = vadd.f32 %v778, %v806
  %808 = vmatmul.f32.gmra.mxu0 %v85
  %v809 = vpop.f32.mrf.mxu0
  %v810 = vadd.f32 %v781, %v809
  %811 = vdwg.mxu0
  %812 = vmatpush.msra.mxu0 %v312
  %813 = vmatpush.msra.mxu0 %v310
  %814 = vmatpush.msra.mxu0 %v308
  %815 = vmatpush.msra.mxu0 %v306
  %816 = vmatpush.msra.mxu0 %v304
  %817 = vmatpush.msra.mxu0 %v302
  %818 = vmatpush.msra.mxu0 %v300
  %819 = vmatpush.msra.mxu0 %v298
  %820 = vmatpush.msra.mxu0 %v296
  %821 = vmatpush.msra.mxu0 %v294
  %822 = vmatpush.msra.mxu0 %v292
  %823 = vmatpush.msra.mxu0 %v290
  %824 = vmatpush.msra.mxu0 %v288
  %825 = vmatpush.msra.mxu0 %v286
  %826 = vmatpush.msra.mxu0 %v284
  %827 = vmatpush.msra.mxu0 %v282
  %828 = vmatmul.f32.gmra.mxu0 %v59
  %v829 = vpop.f32.mrf.mxu0
  %v830 = vadd.f32 %v801, %v829
  %831 = vmatmul.f32.gmra.mxu0 %v68
  %v832 = vpop.f32.mrf.mxu0
  %v833 = vadd.f32 %v804, %v832
  %834 = vmatmul.f32.gmra.mxu0 %v77
  %v835 = vpop.f32.mrf.mxu0
  %v836 = vadd.f32 %v807, %v835
  %837 = vmatmul.f32.gmra.mxu0 %v86
  %v838 = vpop.f32.mrf.mxu0
  %v839 = vadd.f32 %v810, %v838
  %840 = vdwg.mxu0
  %841 = vmatpush.msra.mxu0 %v344
  %842 = vmatpush.msra.mxu0 %v342
  %843 = vmatpush.msra.mxu0 %v340
  %844 = vmatpush.msra.mxu0 %v338
  %845 = vmatpush.msra.mxu0 %v336
  %846 = vmatpush.msra.mxu0 %v334
  %847 = vmatpush.msra.mxu0 %v332
  %848 = vmatpush.msra.mxu0 %v330
  %849 = vmatpush.msra.mxu0 %v328
  %850 = vmatpush.msra.mxu0 %v326
  %851 = vmatpush.msra.mxu0 %v324
  %852 = vmatpush.msra.mxu0 %v322
  %853 = vmatpush.msra.mxu0 %v320
  %854 = vmatpush.msra.mxu0 %v318
  %855 = vmatpush.msra.mxu0 %v316
  %856 = vmatpush.msra.mxu0 %v314
  %857 = vmatmul.f32.gmra.mxu0 %v60
  %v858 = vpop.f32.mrf.mxu0
  %v859 = vadd.f32 %v830, %v858
  %860 = vmatmul.f32.gmra.mxu0 %v69
  %v861 = vpop.f32.mrf.mxu0
  %v862 = vadd.f32 %v833, %v861
  %863 = vmatmul.f32.gmra.mxu0 %v78
  %v864 = vpop.f32.mrf.mxu0
  %v865 = vadd.f32 %v836, %v864
  %866 = vmatmul.f32.gmra.mxu0 %v87
  %v867 = vpop.f32.mrf.mxu0
  %v868 = vadd.f32 %v839, %v867
  %869 = vdwg.mxu0
  %870 = vmatpush.msra.mxu0 %v376
  %871 = vmatpush.msra.mxu0 %v374
  %872 = vmatpush.msra.mxu0 %v372
  %873 = vmatpush.msra.mxu0 %v370
  %874 = vmatpush.msra.mxu0 %v368
  %875 = vmatpush.msra.mxu0 %v366
  %876 = vmatpush.msra.mxu0 %v364
  %877 = vmatpush.msra.mxu0 %v362
  %878 = vmatpush.msra.mxu0 %v360
  %879 = vmatpush.msra.mxu0 %v358
  %880 = vmatpush.msra.mxu0 %v356
  %881 = vmatpush.msra.mxu0 %v354
  %882 = vmatpush.msra.mxu0 %v352
  %883 = vmatpush.msra.mxu0 %v350
  %884 = vmatpush.msra.mxu0 %v348
  %885 = vmatpush.msra.mxu0 %v346
  %886 = vmatmul.f32.gmra.mxu0 %v61
  %v887 = vpop.f32.mrf.mxu0
  %v888 = vadd.f32 %v859, %v887
  %889 = vmatmul.f32.gmra.mxu0 %v70
  %v890 = vpop.f32.mrf.mxu0
  %v891 = vadd.f32 %v862, %v890
  %892 = vmatmul.f32.gmra.mxu0 %v79
  %v893 = vpop.f32.mrf.mxu0
  %v894 = vadd.f32 %v865, %v893
  %895 = vmatmul.f32.gmra.mxu0 %v88
  %v896 = vpop.f32.mrf.mxu0
  %v897 = vadd.f32 %v868, %v896
  %898 = vdwg.mxu0
  %v899 = vmax.f32 %v627, 0.0
  %v900 = vmax.f32 %v888, 0.0
  %v901 = vmax.f32 %v630, 0.0
  %v902 = vmax.f32 %v891, 0.0
  %v903 = vmax.f32 %v633, 0.0
  %v904 = vmax.f32 %v894, 0.0
  %v905 = vmax.f32 %v636, 0.0
  %v906 = vmax.f32 %v897, 0.0
  %v907 = vld [vmem:[%s2] sm:$0xff]
  %v908 = vld [vmem:[%s2 + $0x8] sm:$0xff]
  %v909 = vld [vmem:[%s2 + $0x10] sm:$0xff]
  %v910 = vld [vmem:[%s2 + $0x18] sm:$0xff]
  %v911 = vld [vmem:[%s2 + $0x20] sm:$0xff]
  %v912 = vld [vmem:[%s2 + $0x28] sm:$0xff]
  %v913 = vld [vmem:[%s2 + $0x30] sm:$0xff]
  %v914 = vld [vmem:[%s2 + $0x38] sm:$0xff]
  %v915 = vld [vmem:[%s2 + $0x40] sm:$0xff]
  %v916 = vld [vmem:[%s2 + $0x48] sm:$0xff]
  %v917 = vld [vmem:[%s2 + $0x50] sm:$0xff]
  %v918 = vld [vmem:[%s2 + $0x58] sm:$0xff]
  %v919 = vld [vmem:[%s2 + $0x60] sm:$0xff]
  %v920 = vld [vmem:[%s2 + $0x68] sm:$0xff]
  %v921 = vld [vmem:[%s2 + $0x70] sm:$0xff]
  %v922 = vld [vmem:[%s2 + $0x78] sm:$0xff]
  %v923 = vld [vmem:[%s2 + $0x80] sm:$0xff]
  %v924 = vld [vmem:[%s2 + $0x88] sm:$0xff]
  %v925 = vld [vmem:[%s2 + $0x90] sm:$0xff]
  %v926 = vld [vmem:[%s2 + $0x98] sm:$0xff]
  %v927 = vld [vmem:[%s2 + $0xa0] sm:$0xff]
  %v928 = vld [vmem:[%s2 + $0xa8] sm:$0xff]
  %v929 = vld [vmem:[%s2 + $0xb0] sm:$0xff]
  %v930 = vld [vmem:[%s2 + $0xb8] sm:$0xff]
  %v931 = vld [vmem:[%s2 + $0xc0] sm:$0xff]
  %v932 = vld [vmem:[%s2 + $0xc8] sm:$0xff]
  %v933 = vld [vmem:[%s2 + $0xd0] sm:$0xff]
  %v934 = vld [vmem:[%s2 + $0xd8] sm:$0xff]
  %v935 = vld [vmem:[%s2 + $0xe0] sm:$0xff]
  %v936 = vld [vmem:[%s2 + $0xe8] sm:$0xff]
  %v937 = vld [vmem:[%s2 + $0xf0] sm:$0xff]
  %v938 = vld [vmem:[%s2 + $0xf8] sm:$0xff]
  %v939 = vld [vmem:[%s3] sm:$0x1]
  %v941 = vperm.slane %v939, 0
  %943 = vmatpush.msra.mxu0 %v922
  %944 = vmatpush.msra.mxu0 %v921
  %945 = vmatpush.msra.mxu0 %v920
  %946 = vmatpush.msra.mxu0 %v919
  %947 = vmatpush.msra.mxu0 %v918
  %948 = vmatpush.msra.mxu0 %v917
  %949 = vmatpush.msra.mxu0 %v916
  %950 = vmatpush.msra.mxu0 %v915
  %951 = vmatpush.msra.mxu0 %v914
  %952 = vmatpush.msra.mxu0 %v913
  %953 = vmatpush.msra.mxu0 %v912
  %954 = vmatpush.msra.mxu0 %v911
  %955 = vmatpush.msra.mxu0 %v910
  %956 = vmatpush.msra.mxu0 %v909
  %957 = vmatpush.msra.mxu0 %v908
  %958 = vmatpush.msra.mxu0 %v907
  %959 = vmatmul.f32.gmra.mxu0 %v899
  %v960 = vpop.f32.mrf.mxu0
  %v961 = vadd.f32 %v941, %v960
  %962 = vmatmul.f32.gmra.mxu0 %v901
  %v963 = vpop.f32.mrf.mxu0
  %v964 = vadd.f32 %v941, %v963
  %965 = vmatmul.f32.gmra.mxu0 %v903
  %v966 = vpop.f32.mrf.mxu0
  %v967 = vadd.f32 %v941, %v966
  %968 = vmatmul.f32.gmra.mxu0 %v905
  %v969 = vpop.f32.mrf.mxu0
  %v970 = vadd.f32 %v941, %v969
  %971 = vdwg.mxu0
  %972 = vmatpush.msra.mxu0 %v938
  %973 = vmatpush.msra.mxu0 %v937
  %974 = vmatpush.msra.mxu0 %v936
  %975 = vmatpush.msra.mxu0 %v935
  %976 = vmatpush.msra.mxu0 %v934
  %977 = vmatpush.msra.mxu0 %v933
  %978 = vmatpush.msra.mxu0 %v932
  %979 = vmatpush.msra.mxu0 %v931
  %980 = vmatpush.msra.mxu0 %v930
  %981 = vmatpush.msra.mxu0 %v929
  %982 = vmatpush.msra.mxu0 %v928
  %983 = vmatpush.msra.mxu0 %v927
  %984 = vmatpush.msra.mxu0 %v926
  %985 = vmatpush.msra.mxu0 %v925
  %986 = vmatpush.msra.mxu0 %v924
  %987 = vmatpush.msra.mxu0 %v923
  %988 = vmatmul.f32.gmra.mxu0 %v900
  %v989 = vpop.f32.mrf.mxu0
  %v990 = vadd.f32 %v961, %v989
  %991 = vmatmul.f32.gmra.mxu0 %v902
  %v992 = vpop.f32.mrf.mxu0
  %v993 = vadd.f32 %v964, %v992
  %994 = vmatmul.f32.gmra.mxu0 %v904
  %v995 = vpop.f32.mrf.mxu0
  %v996 = vadd.f32 %v967, %v995
  %997 = vmatmul.f32.gmra.mxu0 %v906
  %v998 = vpop.f32.mrf.mxu0
  %v999 = vadd.f32 %v970, %v998
  %1000 = vdwg.mxu0
  %1001 = vst [vmem:[%s4] sm:$0xff] %v990
  %1002 = vst [vmem:[%s4 + $0x8] sm:$0xff] %v993
  %1003 = vst [vmem:[%s4 + $0x10] sm:$0xff] %v996
  %1004 = vst [vmem:[%s4 + $0x18] sm:$0xff] %v999
  // Predicated region
  $region18: #{segmenthead_forward.1} parent=0 // pred_check
    _
  $region19: #{segmenthead_forward.1} parent=0 // pred_check_branch
    %1006 = sbr.rel (0) target = $region21
  $region20: #{segmenthead_forward.1} parent=0 // pred_region
    _
  $region21: #{segmenthead_forward.1} parent=0 // pred_fallthru
    _
  // Predicated region
  $region22: #{segmenthead_forward.1} parent=0 // pred_check
    _
  $region23: #{segmenthead_forward.1} parent=0 // pred_check_branch
    %1008 = sbr.rel (0) target = $region25
  $region24: #{segmenthead_forward.1} parent=0 // pred_region
    _
  $region25: #{segmenthead_forward.1} parent=0 // pred_fallthru
    _

</llo_original>
